<compile_context>
chip_gen: v7x
topology: tpu7x:2x2x1
jax: 0.10.0
libtpu: 0.0.40
codegen_flags: <defaults>
</compile_context>

<pallas_src>
import functools

import jax
import jax.numpy as jnp
from jax.experimental import pallas as pl
from jax.experimental.pallas import tpu as pltpu

BN_EPS = 1e-5
LN_EPS = 1e-5
SELU_ALPHA = 1.6732632423543772
SELU_SCALE = 1.0507009873554805


# ----------------------------------------------------------------------------
# Shared elementwise activation (used inside the kernels and by the reference)
# ----------------------------------------------------------------------------
def _apply_act(y, act, slope):
    if act == "relu":
        return jnp.maximum(y, 0.0)
    if act == "lrelu":
        return jnp.where(y >= 0.0, y, 0.2 * y)
    if act == "prelu":
        return jnp.where(y >= 0.0, y, slope * y)
    if act == "selu":
        # exp argument clamped to <= 0: exact on the selected branch, avoids inf on the other.
        neg = SELU_ALPHA * (jnp.exp(jnp.minimum(y, 0.0)) - 1.0)
        return SELU_SCALE * jnp.where(y >= 0.0, y, neg)
    if act == "tanh":
        return jnp.tanh(y)
    if act == "none":
        return y
    raise ValueError(f"Unsupported activation: {act}")


# ----------------------------------------------------------------------------
# Pallas kernels
# ----------------------------------------------------------------------------
def _linear_col_kernel(*refs, act, add_bias, use_bn, use_sn, use_slope):
    """Fused Linear (+ spectral-norm scale) (+ BatchNorm1d training mode) (+ activation).

    Grid: (batch tiles, output-feature tiles).  For BN the batch tile is the full batch,
    so per-feature batch statistics are exact inside every column tile.
    Ref order: x, w, [bias], [gamma, beta], [inv_sigma(SMEM)], [slope(SMEM)], out.
    """
    o_ref = refs[-1]
    it = iter(refs[:-1])
    x_ref = next(it)
    w_ref = next(it)
    b_ref = next(it) if add_bias else None
    g_ref = next(it) if use_bn else None
    beta_ref = next(it) if use_bn else None
    sn_ref = next(it) if use_sn else None
    slope_ref = next(it) if use_slope else None

    # bf16 x bf16 -> f32 MXU matmul; everything after stays in f32.
    y = jnp.dot(x_ref[...], w_ref[...], preferred_element_type=jnp.float32)
    if use_sn:
        y = y * sn_ref[0, 0]          # spectral-norm 1/sigma applied post-matmul
    if add_bias:
        y = y + b_ref[...]
    if use_bn:
        # Training-mode BatchNorm1d, centered (two-pass) biased variance on the full batch.
        m = y.shape[0]
        mean = jnp.sum(y, axis=0, keepdims=True) * (1.0 / m)
        d = y - mean
        var = jnp.sum(d * d, axis=0, keepdims=True) * (1.0 / m)
        scale = g_ref[...] * jax.lax.rsqrt(var + BN_EPS)
        y = d * scale + beta_ref[...]

    slope = slope_ref[0, 0] if use_slope else 0.0
    o_ref[...] = _apply_act(y, act, slope)


def _linear_ln_kernel(*refs, act, use_slope):
    """Fused Linear + custom LayerNorm (per-sample, unbiased std) + activation.

    Grid: (batch tiles, K-reduction tiles).  The contraction is accumulated into an f32 VMEM
    scratch so only a (tk, N) weight slab is resident; LN + activation run on the last k step.
    Ref order: x, w, bias, gamma, beta, [slope(SMEM)], out, acc(scratch).
    """
    acc_ref = refs[-1]
    o_ref = refs[-2]
    it = iter(refs[:-2])
    x_ref = next(it)
    w_ref = next(it)
    b_ref = next(it)
    g_ref = next(it)
    beta_ref = next(it)
    slope_ref = next(it) if use_slope else None

    k = pl.program_id(1)

    @pl.when(k == 0)
    def _():
        acc_ref[...] = jnp.zeros_like(acc_ref)

    acc_ref[...] += jnp.dot(x_ref[...], w_ref[...], preferred_element_type=jnp.float32)

    @pl.when(k == pl.num_programs(1) - 1)
    def _():
        y = acc_ref[...] + b_ref[...]
        n = y.shape[1]
        mean = jnp.sum(y, axis=1, keepdims=True) * (1.0 / n)
        d = y - mean
        # Unbiased (ddof=1) variance to match torch.std() in the reference LayerNorm.
        var = jnp.sum(d * d, axis=1, keepdims=True) * (1.0 / max(n - 1, 1))
        inv = pl.reciprocal(jnp.sqrt(var) + LN_EPS, approx=True)   # eps added to std; EUP slot
        y = d * inv
        y = y * g_ref[...] + beta_ref[...]
        slope = slope_ref[0, 0] if use_slope else 0.0
        o_ref[...] = _apply_act(y, act, slope)


# ----------------------------------------------------------------------------
# Tiling / compiler-parameter helpers
# ----------------------------------------------------------------------------
def _pick_tile(n, candidates):
    for t in candidates:
        if n % t == 0:
            return t
    return n  # full dimension is always a legal block shape


def _lane_tile(n):
    # Prefer 512/256-wide lane tiles: fills both halves of the 2x256^2 MXU (v6e/v7x),
    # bigger weight DMAs and fewer grid steps while stores stay lane-dense / unmasked.
    return _pick_tile(n, (512, 256, 128))


def _sublane_tile(m):
    return _pick_tile(m, (512, 256, 128, 64, 32, 16, 8))


@functools.lru_cache(maxsize=None)
def _vmem_limit_bytes():
    # Generation-aware VMEM budget: ~75% of physical, capped at 100 MiB
    # (v5e/v6e: 128 MiB physical -> 96 MiB; v7x: 64 MiB physical -> 48 MiB).
    try:
        cap = int(pltpu.get_tpu_info().vmem_capacity_bytes)
    except Exception:
        cap = 64 * 1024 * 1024
    return int(min(cap * 3 // 4, 100 * 1024 * 1024))


def _compiler_params(dims):
    return pltpu.CompilerParams(
        dimension_semantics=dims,
        vmem_limit_bytes=_vmem_limit_bytes(),
    )


def _cost(M, K, N, act):
    return pl.CostEstimate(
        flops=2 * M * K * N,
        transcendentals=M * N if act in ("selu", "tanh") else 0,
        bytes_accessed=2 * (M * K + K * N) + 4 * M * N,   # bf16 in, f32 out
    )


# ----------------------------------------------------------------------------
# pallas_call wrappers
# ----------------------------------------------------------------------------
def _linear_col_call(x, w_t, b, gamma, beta, inv_sigma, slope, *, norm, act):
    M, K = x.shape
    N = w_t.shape[1]
    use_bn = norm == "bn"
    use_sn = norm == "sn"
    add_bias = not use_bn            # bias before training-mode BN is exactly cancelled
    use_slope = act == "prelu"

    # TODO(synk): for very large batches the BN path keeps the full (M, K) x resident;
    # a batch-chunked two-pass-stats variant would be needed once M*K outgrows VMEM.
    tm = M if use_bn else _sublane_tile(M)
    tn = _lane_tile(N)
    # v7x has two TensorCores: make sure the parallel grid has >= 2 tiles when it legally can.
    if (M // tm) * (N // tn) == 1 and tn >= 256 and (tn // 2) % 128 == 0:
        tn //= 2
    grid = (M // tm, N // tn)

    operands = [x, w_t]
    in_specs = [
        pl.BlockSpec((tm, K), lambda m, n: (m, 0)),
        pl.BlockSpec((K, tn), lambda m, n: (0, n)),
    ]
    if add_bias:
        operands.append(b)
        in_specs.append(pl.BlockSpec((1, tn), lambda m, n: (0, n)))
    if use_bn:
        operands += [gamma, beta]
        in_specs += [pl.BlockSpec((1, tn), lambda m, n: (0, n)),
                     pl.BlockSpec((1, tn), lambda m, n: (0, n))]
    if use_sn:
        operands.append(inv_sigma)
        in_specs.append(pl.BlockSpec(memory_space=pltpu.MemorySpace.SMEM))
    if use_slope:
        operands.append(slope)
        in_specs.append(pl.BlockSpec(memory_space=pltpu.MemorySpace.SMEM))

    kernel = functools.partial(_linear_col_kernel, act=act, add_bias=add_bias,
                               use_bn=use_bn, use_sn=use_sn, use_slope=use_slope)

    # TODO(synk): constant-index blocks (x in the BN path) could use pipeline_mode=pl.Buffered(1)
    # to drop their second buffer; left at the default to keep broad jax-version compatibility.
    return pl.pallas_call(
        kernel,
        out_shape=jax.ShapeDtypeStruct((M, N), jnp.float32),
        grid=grid,
        in_specs=in_specs,
        out_specs=pl.BlockSpec((tm, tn), lambda m, n: (m, n)),
        compiler_params=_compiler_params(("parallel", "parallel")),
        cost_estimate=_cost(M, K, N, act),
    )(*operands)


def _linear_ln_call(x, w_t, b, gamma, beta, slope, *, act):
    M, K = x.shape
    N = w_t.shape[1]
    use_slope = act == "prelu"

    tm = _sublane_tile(M)
    tk = _pick_tile(K, (512, 256, 128))   # K-tiling bounds the resident weight block to (tk, N)
    grid = (M // tm, K // tk)

    operands = [x, w_t, b, gamma, beta]
    in_specs = [
        pl.BlockSpec((tm, tk), lambda m, k: (m, k)),
        pl.BlockSpec((tk, N), lambda m, k: (k, 0)),
        pl.BlockSpec((1, N), lambda m, k: (0, 0)),
        pl.BlockSpec((1, N), lambda m, k: (0, 0)),
        pl.BlockSpec((1, N), lambda m, k: (0, 0)),
    ]
    if use_slope:
        operands.append(slope)
        in_specs.append(pl.BlockSpec(memory_space=pltpu.MemorySpace.SMEM))

    kernel = functools.partial(_linear_ln_kernel, act=act, use_slope=use_slope)

    return pl.pallas_call(
        kernel,
        out_shape=jax.ShapeDtypeStruct((M, N), jnp.float32),
        grid=grid,
        in_specs=in_specs,
        out_specs=pl.BlockSpec((tm, N), lambda m, k: (m, 0)),
        scratch_shapes=[pltpu.VMEM((tm, N), jnp.float32)],
        compiler_params=_compiler_params(("parallel", "arbitrary")),
        cost_estimate=_cost(M, K, N, act),
    )(*operands)


# ----------------------------------------------------------------------------
# SpectralNorm: matvec-only power iteration -> scalar 1/sigma (no weight rewrite)
# ----------------------------------------------------------------------------
def _l2normalize(v, eps=1e-12):
    return v / (jnp.linalg.norm(v) + eps)


def _spectral_inv_sigma(w_t, u, v, power_iterations=1):
    # PyTorch SpectralNorm power iteration on w == w_t.T, expressed purely as matvecs against
    # the (K, N) pre-transposed weight; never materializes a transposed or rescaled weight copy.
    wt = w_t.astype(jnp.float32)
    for _ in range(power_iterations):
        v = _l2normalize(jnp.dot(wt, u))    # (K,)  == w.T @ u
        u = _l2normalize(jnp.dot(v, wt))    # (N,)  == w   @ v
    sigma = jnp.dot(u, jnp.dot(v, wt))
    return (1.0 / sigma).astype(jnp.float32)


# ----------------------------------------------------------------------------
# LinearBlock forward (training-mode semantics)
# ----------------------------------------------------------------------------
@functools.partial(jax.jit, static_argnames=("norm", "act"))
def linear_block_forward(x, params, norm="none", act="relu"):
    if norm == "in":
        # TODO(synk): nn.InstanceNorm1d on the 2-D (batch, features) Linear output requires a
        # 3-D tensor in PyTorch; there is no well-defined forward to reproduce.
        raise NotImplementedError("norm='in' is undefined for 2-D LinearBlock input")

    w_t = params["w_t"]                              # (K, N), pre-transposed, bf16
    x_lo = x.astype(jnp.bfloat16)                    # MXU operands in bf16, accumulate in f32
    b = params["b"].reshape(1, -1).astype(jnp.float32)
    gamma = params["gamma"].reshape(1, -1).astype(jnp.float32)
    beta = params["beta"].reshape(1, -1).astype(jnp.float32)
    slope = params["slope"].reshape(1, 1).astype(jnp.float32)

    if norm == "sn":
        # TODO(synk): the PyTorch module also updates u/v in place; stateless forward here.
        inv_sigma = _spectral_inv_sigma(w_t, params["u"], params["v"]).reshape(1, 1)
    else:
        inv_sigma = jnp.ones((1, 1), jnp.float32)

    if norm == "ln":
        return _linear_ln_call(x_lo, w_t, b, gamma, beta, slope, act=act)
    return _linear_col_call(x_lo, w_t, b, gamma, beta, inv_sigma, slope, norm=norm, act=act)


# ----------------------------------------------------------------------------
# Pure-JAX reference (PyTorch semantics, same bf16-matmul precision as the kernel)
# ----------------------------------------------------------------------------
def linear_block_ref(x, params, norm, act):
    w_t = params["w_t"]
    y = jnp.dot(x.astype(jnp.bfloat16), w_t, preferred_element_type=jnp.float32)
    if norm == "sn":
        y = y * _spectral_inv_sigma(w_t, params["u"], params["v"])
    y = y + params["b"][None, :]
    if norm == "bn":
        mean = jnp.mean(y, axis=0, keepdims=True)
        var = jnp.mean((y - mean) ** 2, axis=0, keepdims=True)
        y = (y - mean) / jnp.sqrt(var + BN_EPS)
        y = y * params["gamma"][None, :] + params["beta"][None, :]
    elif norm == "ln":
        mean = jnp.mean(y, axis=1, keepdims=True)
        std = jnp.std(y, axis=1, keepdims=True, ddof=1)
        y = (y - mean) / (std + LN_EPS)
        y = y * params["gamma"][None, :] + params["beta"][None, :]
    return _apply_act(y, act, params["slope"])


def make_linear_block_params(key, input_c, output_c):
    kw, kb, kg, ku, kv = jax.random.split(key, 5)
    w = jax.random.normal(kw, (output_c, input_c), jnp.float32) * (input_c ** -0.5)
    b = jax.random.normal(kb, (output_c,), jnp.float32) * 0.01
    gamma = jax.random.uniform(kg, (output_c,), jnp.float32)   # LayerNorm init; any value valid for BN
    beta = jnp.zeros((output_c,), jnp.float32)
    u = _l2normalize(jax.random.normal(ku, (output_c,), jnp.float32))
    v = _l2normalize(jax.random.normal(kv, (input_c,), jnp.float32))
    slope = jnp.asarray(0.25, jnp.float32)                     # nn.PReLU() default
    return dict(
        # Weight stored pre-transposed (input_c, output_c) and in bf16: the kernel's MXU operand
        # layout, avoiding a per-call K*N transpose + cast pass over HBM.
        w_t=jnp.asarray(w.T, jnp.bfloat16),
        b=b, gamma=gamma, beta=beta, u=u, v=v, slope=slope)


# TODO(synk): BatchNorm1d running_mean/running_var momentum buffer updates are not reproduced;
# only the training-mode forward normalization (batch statistics) is.

if __name__ == "__main__":
    key = jax.random.PRNGKey(0)
    k_x, k_p = jax.random.split(key)

    batch, input_c, output_c = 8, 64, 256
    x = jax.random.normal(k_x, (batch, input_c), dtype=jnp.float32)
    params = make_linear_block_params(k_p, input_c, output_c)

    configs = [
        ("none", "relu"),    # LinearBlock defaults
        ("bn", "prelu"),     # bias-free matmul + fused batch-stat BN + SMEM PReLU slope
        ("ln", "tanh"),      # K-tiled accumulator + fused per-row LayerNorm
        ("sn", "lrelu"),     # spectral norm as an SMEM 1/sigma scalar, weight never rewritten
        ("none", "selu"),
    ]
    for norm, act in configs:
        out = jax.block_until_ready(linear_block_forward(x, params, norm=norm, act=act))
        ref = linear_block_ref(x, params, norm, act)
        assert out.shape == (batch, output_c)
        assert bool(jnp.all(jnp.isfinite(out)))
        tol = 2e-2 if norm == "ln" else 2e-3      # 'ln' uses the EUP approx reciprocal
        err = float(jnp.max(jnp.abs(out - ref)))
        assert err < tol, f"{norm}/{act}: max abs err {err}"

    print("KERNEL_OK")
</pallas_src>

<mosaic_0001>
module attributes {stable_mosaic.version = 11 : i64} {
  func.func @_linear_col_kernel(%arg0: i32, %arg1: i32, %arg2: memref<8x64xbf16, #tpu.memory_space<vmem>>, %arg3: memref<64x128xbf16, #tpu.memory_space<vmem>>, %arg4: memref<1x128xf32, #tpu.memory_space<vmem>>, %arg5: memref<8x128xf32, #tpu.memory_space<vmem>>) attributes {dimension_semantics = [#tpu.dimension_semantics<parallel>, #tpu.dimension_semantics<parallel>], iteration_bounds = array<i64: 1, 2>, scalar_prefetch = 0 : i64, scratch_operands = 0 : i64, tpu.core_type = #tpu.core_type<tc>, window_params = [{transform_indices = @transform_0, window_bounds = array<i64: 8, 64>}, {transform_indices = @transform_1, window_bounds = array<i64: 64, 128>}, {transform_indices = @transform_2, window_bounds = array<i64: 1, 128>}, {transform_indices = @transform_3, window_bounds = array<i64: 8, 128>}]} {
    %c0 = arith.constant 0 : index
    %c0_0 = arith.constant 0 : index
    %0 = vector.load %arg2[%c0, %c0_0] : memref<8x64xbf16, #tpu.memory_space<vmem>>, vector<8x64xbf16>
    %c0_1 = arith.constant 0 : index
    %c0_2 = arith.constant 0 : index
    %1 = vector.load %arg3[%c0_1, %c0_2] : memref<64x128xbf16, #tpu.memory_space<vmem>>, vector<64x128xbf16>
    %cst = arith.constant dense<0.000000e+00> : vector<8x128xf32>
    %2 = tpu.matmul %0, %1, %cst {dimension_numbers = #tpu.dot_dimension_numbers<[1], [0], [0], [1], [0, 0, 1, 1], [], []>} : vector<8x64xbf16>, vector<64x128xbf16>, vector<8x128xf32> -> vector<8x128xf32>
    %c0_3 = arith.constant 0 : index
    %c0_4 = arith.constant 0 : index
    %3 = vector.load %arg4[%c0_3, %c0_4] : memref<1x128xf32, #tpu.memory_space<vmem>>, vector<1x128xf32>
    %4 = vector.broadcast %3 : vector<1x128xf32> to vector<8x128xf32>
    %5 = arith.addf %2, %4 : vector<8x128xf32>
    %cst_5 = arith.constant 0.000000e+00 : f32
    %6 = vector.broadcast %cst_5 : f32 to vector<8x128xf32>
    %7 = arith.maximumf %5, %6 : vector<8x128xf32>
    %c0_6 = arith.constant 0 : index
    %c0_7 = arith.constant 0 : index
    %8 = vector.load %arg5[%c0_6, %c0_7] : memref<8x128xf32, #tpu.memory_space<vmem>>, vector<8x128xf32>
    tpu.vector_store %arg5[%c0_6, %c0_7], %7 {strides = array<i32>} : memref<8x128xf32, #tpu.memory_space<vmem>>, vector<8x128xf32>,
    return
  }
  func.func @transform_0(%arg0: i32, %arg1: i32) -> (i32, i32) {
    %c0_i32 = arith.constant 0 : i32
    %c0_i32_0 = arith.constant 0 : i32
    return %arg0, %c0_i32 : i32, i32
  }
  func.func @transform_1(%arg0: i32, %arg1: i32) -> (i32, i32) {
    %c0_i32 = arith.constant 0 : i32
    %c0_i32_0 = arith.constant 0 : i32
    return %c0_i32, %arg1 : i32, i32
  }
  func.func @transform_2(%arg0: i32, %arg1: i32) -> (i32, i32) {
    %c0_i32 = arith.constant 0 : i32
    %c0_i32_0 = arith.constant 0 : i32
    return %c0_i32, %arg1 : i32, i32
  }
  func.func @transform_3(%arg0: i32, %arg1: i32) -> (i32, i32) {
    %c0_i32 = arith.constant 0 : i32
    return %arg0, %arg1 : i32, i32
  }
}

</mosaic_0001>

<llo_original>
// kernel: linear_block_forward.1
$region0: #{linear_block_forward.1}
  #allocation0 [shape = 'u32[]', space=smem, size = 0x4, offset = 0x4, fixed_abs, tag = 'smem constant byte address 0x4 - core index']
  #allocation1 [shape = 'u32[144,128]{1,0:T(1,128)}', space=vmem, size = 0x12000, scoped, tag = 'internal scratch']
  %s0 = inlined_call_operand.vmem [shape: bf16[8,64], index: 0, kind: input, shape index: {}]
  %s1 = inlined_call_operand.hbm [shape: bf16[64,256], index: 1, kind: input, shape index: {}]
  %s2 = inlined_call_operand.vmem [shape: f32[1,256], index: 2, kind: input, shape index: {}]
  %s3 = inlined_call_operand.hbm [shape: f32[8,256], index: 3, kind: output, shape index: {}]
  %s4 = sld [smem:[#allocation0]]
  $region49: #{linear_block_forward.1} parent=0
    _
  %s6 = ssub.s32 1, %s4
  %s7 = scalar_select 0, %s6, %s4
  $region1: #{linear_block_forward.1} parent=0
    #allocation2 [shape = 'u8[32768]{0}', space=vmem, size = 0x8000, scoped, tag = 'input window, operand 1']
    #allocation3 [shape = 's32[2]{0}', space=sflag, size = 0x8, scoped, tag = 'scoped memory for linear_block_forward.1']
    #allocation4 [shape = 's32[2]{0}', space=sflag, size = 0x8, scoped, tag = 'scoped memory for linear_block_forward.1']
    #allocation5 [shape = 'u8[8192]{0}', space=vmem, size = 0x2000, scoped, tag = 'output window, operand 0']
    %8 = vsyncpa [#allocation3], 0
    %s9 = scalar_lea.sflag [#allocation3], 1
    %10 = vsyncpa %s9, 0
    %11 = vsyncpa [#allocation4], 0
    %s12 = scalar_lea.sflag [#allocation4], 1
    %13 = vsyncpa %s12, 0
    loop: start=0, step=1, limit=4
    $region2: #{linear_block_forward.1} parent=1 // loop_pre_header
      _
    $region3: #{linear_block_forward.1} parent=1 // loop_header
      %s15 = sphi 0, %s19
      %p16 = scmp.ge.s32.totalorder %s15, 4
      %s22 = sphi 0, %s34
      %s23 = sphi 0, %s30
      %s24 = sphi 0, %s22
      %s25 = sphi 0, %s23
      %s26 = sphi 0, %s24
      %s27 = sphi 0, %s25
      %s37 = sphi 0, %s39
      %s40 = sphi 0, %s37
      %s41 = sphi 0, %s40
      %s57 = sphi 0, %s41
      %s63 = sphi 0, %s65
      %s66 = sphi 0, %s63
      %s67 = sphi 0, %s66
      %s83 = sphi 0, %s67
      %s89 = sphi 0, %s91
      %s92 = sphi 0, %s89
      %s93 = sphi 0, %s92
      %s109 = sphi 0, %s93
      %s117 = sphi 0, %s119
      %s120 = sphi 0, %s117
      %s121 = sphi 0, %s120
      %s137 = sphi 0, %s121
    $region4: #{linear_block_forward.1} parent=1 // loop_header_branch
      %18 = sbr.rel (%p16) target = $region8
    $region5: #{linear_block_forward.1} parent=1 // loop_body
      %s20 = ssub.s32 %s15, 1
      %s21 = ssub.s32 %s15, 2
      %s28 = sadd.s32 1, %s23
      %p29 = scmp.ge.s32.totalorder %s28, 2
      %s30 = scalar_select %p29, 0, %s28
      %s31 = sadd.s32 1, %s22
      %s32 = scalar_select %p29, %s31, %s22
      %p33 = scmp.ge.s32.totalorder %s32, 1
      %s34 = scalar_select %p33, 0, %s32
      %s35 = ssub.s32 %s22, %s34
      %p36 = scmp.eq.s32.totalorder %s35, 0
      %s38 = sadd.s32 %s37, 1
      %s39 = scalar_select %p36, %s37, %s38
      %p42 = pneg %p36
      %p43 = scmp.eq.s32.totalorder %s15, 1
      %p44 = por %p42, %p43
      %p45 = scmp.ne.s32.totalorder %s37, %s40
      %p46 = scmp.eq.s32.totalorder %s15, 0
      %p47 = por %p45, %p46
      %p48 = scmp.ne.s32.totalorder %s37, %s40
      %p49 = scmp.eq.s32.totalorder %s20, 1
      %p50 = por %p48, %p49
      %p51 = scmp.ne.s32.totalorder %s40, %s41
      %p52 = scmp.eq.s32.totalorder %s20, 0
      %p53 = por %p51, %p52
      %p54 = scmp.ne.s32.totalorder %s40, %s41
      %p55 = scmp.eq.s32.totalorder %s21, 1
      %p56 = por %p54, %p55
      %p58 = scmp.ne.s32.totalorder %s41, %s57
      %p59 = scmp.eq.s32.totalorder %s21, 0
      %p60 = por %p58, %p59
      %s61 = ssub.s32 %s23, %s30
      %p62 = scmp.eq.s32.totalorder %s61, 0
      %s64 = sadd.s32 %s63, 1
      %s65 = scalar_select %p62, %s63, %s64
      %p68 = pneg %p62
      %p69 = scmp.eq.s32.totalorder %s15, 1
      %p70 = por %p68, %p69
      %p71 = scmp.ne.s32.totalorder %s63, %s66
      %p72 = scmp.eq.s32.totalorder %s15, 0
      %p73 = por %p71, %p72
      %p74 = scmp.ne.s32.totalorder %s63, %s66
      %p75 = scmp.eq.s32.totalorder %s20, 1
      %p76 = por %p74, %p75
      %p77 = scmp.ne.s32.totalorder %s66, %s67
      %p78 = scmp.eq.s32.totalorder %s20, 0
      %p79 = por %p77, %p78
      %p80 = scmp.ne.s32.totalorder %s66, %s67
      %p81 = scmp.eq.s32.totalorder %s21, 1
      %p82 = por %p80, %p81
      %p84 = scmp.ne.s32.totalorder %s67, %s83
      %p85 = scmp.eq.s32.totalorder %s21, 0
      %p86 = por %p84, %p85
      %s87 = ssub.s32 %s23, %s30
      %p88 = scmp.eq.s32.totalorder %s87, 0
      %s90 = sadd.s32 %s89, 1
      %s91 = scalar_select %p88, %s89, %s90
      %p94 = pneg %p88
      %p95 = scmp.eq.s32.totalorder %s15, 1
      %p96 = por %p94, %p95
      %p97 = scmp.ne.s32.totalorder %s89, %s92
      %p98 = scmp.eq.s32.totalorder %s15, 0
      %p99 = por %p97, %p98
      %p100 = scmp.ne.s32.totalorder %s89, %s92
      %p101 = scmp.eq.s32.totalorder %s20, 1
      %p102 = por %p100, %p101
      %p103 = scmp.ne.s32.totalorder %s92, %s93
      %p104 = scmp.eq.s32.totalorder %s20, 0
      %p105 = por %p103, %p104
      %p106 = scmp.ne.s32.totalorder %s92, %s93
      %p107 = scmp.eq.s32.totalorder %s21, 1
      %p108 = por %p106, %p107
      %p110 = scmp.ne.s32.totalorder %s93, %s109
      %p111 = scmp.eq.s32.totalorder %s21, 0
      %p112 = por %p110, %p111
      %s113 = ssub.s32 %s22, %s34
      %s114 = ssub.s32 %s23, %s30
      %s115 = sor.u32 %s113, %s114
      %p116 = scmp.eq.s32.totalorder %s115, 0
      %s118 = sadd.s32 %s117, 1
      %s119 = scalar_select %p116, %s117, %s118
      %p122 = pneg %p116
      %p123 = scmp.eq.s32.totalorder %s15, 1
      %p124 = por %p122, %p123
      %p125 = scmp.ne.s32.totalorder %s117, %s120
      %p126 = scmp.eq.s32.totalorder %s15, 0
      %p127 = por %p125, %p126
      %p128 = scmp.ne.s32.totalorder %s117, %s120
      %p129 = scmp.eq.s32.totalorder %s20, 1
      %p130 = por %p128, %p129
      %p131 = scmp.ne.s32.totalorder %s120, %s121
      %p132 = scmp.eq.s32.totalorder %s20, 0
      %p133 = por %p131, %p132
      %p134 = scmp.ne.s32.totalorder %s120, %s121
      %p135 = scmp.eq.s32.totalorder %s21, 1
      %p136 = por %p134, %p135
      %p138 = scmp.ne.s32.totalorder %s121, %s137
      %p139 = scmp.eq.s32.totalorder %s21, 0
      %p140 = por %p138, %p139
      %p141 = scmp.le.s32.totalorder 1, %s15
      %p142 = scmp.lt.s32.totalorder %s15, 3
      %p143 = pnand %p141, %p142
      %p144 = pneg %p143
      // Predicated region
      $region9: #{linear_block_forward.1} parent=5 // pred_check
        _
      $region10: #{linear_block_forward.1} parent=5 // pred_check_branch
        %146 = sbr.rel (%p143) target = $region12
      $region11: #{linear_block_forward.1} parent=5 // pred_region
        %s147 = ssub.s32 %s15, 1
        // Predicated region
        $region13: #{linear_block_forward.1} parent=11 // pred_check
          %p148 = pneg %p53
        $region14: #{linear_block_forward.1} parent=11 // pred_check_branch
          %150 = sbr.rel (%p148) target = $region16
        $region15: #{linear_block_forward.1} parent=11 // pred_region
          %p151 = scmp.lt.s32.totalorder %s24, 0
          %s152 = scalar_select %p151, %s24, 0
          %s153 = smul.addr %s152, 4
          %s154 = scalar_lea.vmem %s0, %s153
        $region16: #{linear_block_forward.1} parent=11 // pred_fallthru
          _
      $region12: #{linear_block_forward.1} parent=5 // pred_fallthru
        _
      %p155 = scmp.lt.s32.totalorder %s15, 2
      // Predicated region
      $region17: #{linear_block_forward.1} parent=5 // pred_check
        %p156 = pneg %p155
      $region18: #{linear_block_forward.1} parent=5 // pred_check_branch
        %158 = sbr.rel (%p156) target = $region20
      $region19: #{linear_block_forward.1} parent=5 // pred_region
        // Predicated region
        $region21: #{linear_block_forward.1} parent=19 // pred_check
          %p159 = pneg %p73
        $region22: #{linear_block_forward.1} parent=19 // pred_check_branch
          %161 = sbr.rel (%p159) target = $region24
        $region23: #{linear_block_forward.1} parent=19 // pred_region
          %s162 = sand.u32 %s63, 1
          %s163 = scalar_lea.sflag [#allocation3], %s162
          %s164 = sand.u32 %s63, 1
          %s165 = smul.addr %s164, 32
          %s166 = scalar_lea.vmem [#allocation2], %s165
          %s168 = ssub.s32 512, 512
          %169 = vsyncadd %s163, %s168
          %s170 = smul.addr %s23, 64
          %s171 = scalar_lea.hbm %s1, %s170
          %s172 = sshll.u32 %s166, 4
          %s173 = int_to_ptr.vmem [resolvable:$true] %s172
          %178 = dma.hbm_to_vmem [thread:$0]  %s171, 512, %s173, %s163, 128, 64, 4
        $region24: #{linear_block_forward.1} parent=19 // pred_fallthru
          _
        // Predicated region
        $region25: #{linear_block_forward.1} parent=19 // pred_check
          %p179 = pneg %p99
        $region26: #{linear_block_forward.1} parent=19 // pred_check_branch
          %181 = sbr.rel (%p179) target = $region28
        $region27: #{linear_block_forward.1} parent=19 // pred_region
          %p182 = scmp.lt.s32.totalorder %s23, 1
          %s183 = scalar_select %p182, %s23, 1
          %s184 = scalar_lea.vmem %s2, %s183
        $region28: #{linear_block_forward.1} parent=19 // pred_fallthru
          _
      $region20: #{linear_block_forward.1} parent=5 // pred_fallthru
        _
      %p185 = scmp.le.s32.totalorder 1, %s15
      %p186 = scmp.lt.s32.totalorder %s15, 3
      %p187 = pnand %p185, %p186
      %p188 = pneg %p187
      // Predicated region
      $region29: #{linear_block_forward.1} parent=5 // pred_check
        _
      $region30: #{linear_block_forward.1} parent=5 // pred_check_branch
        %190 = sbr.rel (%p187) target = $region32
      $region31: #{linear_block_forward.1} parent=5 // pred_region
        %s191 = ssub.s32 %s15, 1
        %s192 = sand.u32 %s66, 1
        %s193 = scalar_lea.sflag [#allocation3], %s192
        %s194 = sand.u32 %s66, 1
        %s195 = smul.addr %s194, 32
        %s196 = scalar_lea.vmem [#allocation2], %s195
        // Predicated region
        $region33: #{linear_block_forward.1} parent=31 // pred_check
          %p197 = pneg %p79
        $region34: #{linear_block_forward.1} parent=31 // pred_check_branch
          %199 = sbr.rel (%p197) target = $region36
        $region35: #{linear_block_forward.1} parent=31 // pred_region
          %200 = dma.done %s193, 512
        $region36: #{linear_block_forward.1} parent=31 // pred_fallthru
          _
        %p201 = scmp.lt.s32.totalorder %s24, 0
        %s202 = scalar_select %p201, %s24, 0
        %s203 = smul.addr %s202, 4
        %s204 = scalar_lea.vmem %s0, %s203
        %p205 = pneg %p53
        %p206 = pneg %p50
        %s207 = sand.u32 %s66, 1
        %s208 = scalar_lea.sflag [#allocation3], %s207
        %s209 = sand.u32 %s66, 1
        %s210 = smul.addr %s209, 32
        %s211 = scalar_lea.vmem [#allocation2], %s210
        %p212 = pneg %p79
        %p213 = pneg %p76
        %p214 = scmp.lt.s32.totalorder %s25, 1
        %s215 = scalar_select %p214, %s25, 1
        %s216 = scalar_lea.vmem %s2, %s215
        %p217 = pneg %p105
        %p218 = pneg %p102
        %p219 = pneg %p133
        %p220 = pneg %p130
        %s221 = sand.u32 %s120, 1
        %s222 = scalar_lea.sflag [#allocation4], %s221
        %s223 = sand.u32 %s120, 1
        %s224 = smul.addr %s223, 8
        %s225 = scalar_lea.vmem [#allocation5], %s224
        %p226 = scmp.lt.s32.totalorder %s24, 0
        %s227 = scalar_select %p226, %s24, 0
        %s228 = smul.addr %s227, 4
        %s229 = scalar_lea.vmem %s0, %s228
        %p230 = scmp.lt.s32.totalorder %s25, 1
        %s231 = scalar_select %p230, %s25, 1
        %s232 = scalar_lea.vmem %s2, %s231
        %v234 = vld [vmem:[%s229] sm:$0xf]
        %v235 = vld [vmem:[%s196] sm:$0xf]
        %v236 = vld [vmem:[%s196 + $0x4] sm:$0xf]
        %v237 = vld [vmem:[%s196 + $0x8] sm:$0xf]
        %v238 = vld [vmem:[%s196 + $0xc] sm:$0xf]
        %v239 = vld [vmem:[%s196 + $0x10] sm:$0xf]
        %v240 = vld [vmem:[%s196 + $0x14] sm:$0xf]
        %v241 = vld [vmem:[%s196 + $0x18] sm:$0xf]
        %v242 = vld [vmem:[%s196 + $0x1c] sm:$0xf]
        %v243 = vld [vmem:[%s232] sm:$0x1]
        %v245 = vlaneseq
        %v246 = vshrl.u32 %v245, 7
        %v247 = vsub.s32 0, %v246
        %v248 = vrot.slane %v243, %v247
        %v258 = vunpack.c.l.b16 %v235
        %v259 = vunpack.c.l.b16 %v236
        %v260 = vunpack.c.l.b16 %v237
        %v261 = vunpack.c.l.b16 %v238
        %v262 = vunpack.c.l.b16 %v239
        %v263 = vunpack.c.l.b16 %v240
        %v264 = vunpack.c.l.b16 %v241
        %v265 = vunpack.c.l.b16 %v242
        %v266 = vpack.c.b16 %v259, %v258
        %v267 = vpack.c.b16 %v261, %v260
        %v268 = vpack.c.b16 %v263, %v262
        %v269 = vpack.c.b16 %v265, %v264
        %vm274 = vcmask 523264
        %v276 = vsel %vm274, %v234, 0
        %278 = vmatprep.subr.bf16.mxu0 0
        %279 = vmatpush1.bf16.msra.mxu0 %v266
        %280 = vmatprep.subr.bf16.mxu0 0
        %281 = vmatpush1.bf16.msra.mxu0 %v267
        %282 = vmatprep.subr.bf16.mxu0 0
        %283 = vmatpush1.bf16.msra.mxu0 %v268
        %284 = vmatprep.subr.bf16.mxu0 0
        %285 = vmatpush1.bf16.msra.mxu0 %v269
        %286 = vmatprep.subr.bf16.mxu0 0
        %287 = vmatpush1.bf16.msra.mxu0 0
        %288 = vmatprep.subr.bf16.mxu0 0
        %289 = vmatpush1.bf16.msra.mxu0 0
        %290 = vmatprep.subr.bf16.mxu0 0
        %291 = vmatpush1.bf16.msra.mxu0 0
        %292 = vmatprep.subr.bf16.mxu0 0
        %293 = vmatpush1.bf16.msra.mxu0 0
        %294 = vmatprep.subr.bf16.mxu0 0
        %295 = vmatpush1.bf16.msra.mxu0 0
        %296 = vmatprep.subr.bf16.mxu0 0
        %297 = vmatpush1.bf16.msra.mxu0 0
        %298 = vmatprep.subr.bf16.mxu0 0
        %299 = vmatpush1.bf16.msra.mxu0 0
        %300 = vmatprep.subr.bf16.mxu0 0
        %301 = vmatpush1.bf16.msra.mxu0 0
        %302 = vmatprep.subr.bf16.mxu0 0
        %303 = vmatpush1.bf16.msra.mxu0 0
        %304 = vmatprep.subr.bf16.mxu0 0
        %305 = vmatpush1.bf16.msra.mxu0 0
        %306 = vmatprep.subr.bf16.mxu0 0
        %307 = vmatpush1.bf16.msra.mxu0 0
        %308 = vmatprep.subr.bf16.mxu0 0
        %309 = vmatpush1.bf16.msra.mxu0 0
        %310 = vmatprep.mubr.bf16.mxu0 0
        %311 = vmatmul.mubr.bf16.gmra.mrb[0].mxu0 %v276
        %v312 = vpop.f32.mrb[0].mxu0
        %v313 = vadd.f32 %v248, %v312
        %v314 = vpop.f32.mrb[0].mxu0
        %v315 = vpop.f32.mrb[0].mxu0
        %v316 = vpop.f32.mrb[0].mxu0
        %317 = vdwg.mxu0
        %v318 = vmax.f32 %v313, 0.0
        %319 = vst [vmem:[%s225] sm:$0xff] %v318
        %s320 = sand.u32 %s120, 1
        %s321 = scalar_lea.sflag [#allocation4], %s320
        %s322 = sand.u32 %s120, 1
        %s323 = smul.addr %s322, 8
        %s324 = scalar_lea.vmem [#allocation5], %s323
        // Predicated region
        $region37: #{linear_block_forward.1} parent=31 // pred_check
          %p325 = pneg %p130
        $region38: #{linear_block_forward.1} parent=31 // pred_check_branch
          %327 = sbr.rel (%p325) target = $region40
        $region39: #{linear_block_forward.1} parent=31 // pred_region
          %s329 = ssub.s32 128, 128
          %330 = vsyncadd %s321, %s329
          %s331 = smul.addr %s24, 2
          %s332 = sadd.s32 %s25, %s331
          %s333 = smul.addr %s332, 128
          %s334 = scalar_lea.hbm %s3, %s333
          %s336 = sshll.u32 %s324, 4
          %s337 = int_to_ptr.vmem [resolvable:$true] %s336
          %339 = dma.vmem_to_hbm [thread:$0]  %s337, 128, %s334, %s321
        $region40: #{linear_block_forward.1} parent=31 // pred_fallthru
          _
      $region32: #{linear_block_forward.1} parent=5 // pred_fallthru
        _
      %p340 = scmp.le.s32.totalorder 2, %s15
      // Predicated region
      $region41: #{linear_block_forward.1} parent=5 // pred_check
        %p341 = pneg %p340
      $region42: #{linear_block_forward.1} parent=5 // pred_check_branch
        %343 = sbr.rel (%p341) target = $region44
      $region43: #{linear_block_forward.1} parent=5 // pred_region
        %s344 = ssub.s32 %s15, 2
        // Predicated region
        $region45: #{linear_block_forward.1} parent=43 // pred_check
          %p345 = pneg %p136
        $region46: #{linear_block_forward.1} parent=43 // pred_check_branch
          %347 = sbr.rel (%p345) target = $region48
        $region47: #{linear_block_forward.1} parent=43 // pred_region
          %s348 = sand.u32 %s121, 1
          %s349 = scalar_lea.sflag [#allocation4], %s348
          %s350 = sand.u32 %s121, 1
          %s351 = smul.addr %s350, 8
          %s352 = scalar_lea.vmem [#allocation5], %s351
          %353 = dma.done %s349, 128
        $region48: #{linear_block_forward.1} parent=43 // pred_fallthru
          _
      $region44: #{linear_block_forward.1} parent=5 // pred_fallthru
        _
    $region6: #{linear_block_forward.1} parent=1 // loop_footer
      %s19 = sadd.s32 1, %s15
    $region7: #{linear_block_forward.1} parent=1 // loop_footer_branch
      %14 = sbr.rel target = $region3
    $region8: #{linear_block_forward.1} parent=1 // loop_exit
      _
    %354 = vsyncpa [#allocation3], 1
    %s355 = scalar_lea.sflag [#allocation3], 1
    %356 = vsyncpa %s355, 1
    %357 = vsyncpa [#allocation4], 1
    %s358 = scalar_lea.sflag [#allocation4], 1
    %359 = vsyncpa %s358, 1

</llo_original>
